<compile_context>
chip_gen: v5e
topology: v5e:2x2
jax: 0.10.0
libtpu: 0.0.40
codegen_flags: <defaults>
</compile_context>

<pallas_src>
import functools
import math

import jax
import jax.numpy as jnp
from jax import lax
from jax.experimental import pallas as pl
from jax.experimental.pallas import tpu as pltpu

_LANE = 128


# ------------------------------ Pallas kernel --------------------------------


def _conv_stats_kernel(x_ref, w_ref, y_ref, st_ref):
    """One (image, Ho row-block): conv as a single big-M dot + fused BN partials.

    x_ref : (1, RB*Wo, K)      bf16  im2col rows for this row-block
    w_ref : (K, Coutp)         bf16  constant across the grid (stays resident)
    y_ref : (1, RB*Wo, Coutp)  bf16  conv output tile (lane-dense Coutp)
    st_ref: (1, 1, 2, Coutp)   f32   row 0 = channel sum, row 1 = channel sum-of-squares
    """
    # Single MXU dot with M = RB*Wo (>= 256 by tile choice) and f32 accumulation.
    acc = jnp.dot(x_ref[0], w_ref[...], preferred_element_type=jnp.float32)
    y_ref[0] = acc.astype(y_ref.dtype)

    # BN partial statistics straight from the f32 accumulator already in vregs
    # (no re-read of y_ref); reductions ride VPU/XLU slots idle during the dot.
    s = jnp.sum(acc, axis=0, keepdims=True)          # (1, Coutp)
    q = jnp.sum(acc * acc, axis=0, keepdims=True)    # (1, Coutp)
    st_ref[0, 0] = jnp.concatenate([s, q], axis=0)   # (2, Coutp)


# ------------------------------ tile sizing -----------------------------------


def _vmem_limit_bytes():
    """Generation-specific scoped-VMEM budget (review: don't share one 32 MiB cap)."""
    try:
        kind = jax.devices()[0].device_kind.lower()
    except Exception:
        kind = ""
    if "v5" in kind or "v6" in kind:
        return 96 * 1024 * 1024      # 128 MiB physical VMEM parts: allow big tiles
    return 48 * 1024 * 1024          # v7x: 64 MiB/TC physical; also a safe default


def _pick_row_block(ho, wo, kdim, coutp, vmem_limit):
    """Rows of Ho per grid step: MXU M = RB*Wo targeted ~1024, VMEM-bounded, mult of 8."""
    kd_pad = max(kdim, _LANE)                        # lane padding in VMEM
    per_row = wo * (2 * 2 * kd_pad                   # x tile, bf16, double-buffered
                    + 2 * 2 * coutp                  # y tile, bf16, double-buffered
                    + 4 * coutp)                     # f32 accumulator temporary
    budget = int(vmem_limit * 0.6) - 2 * 2 * kd_pad * coutp   # minus resident weights
    rb_cap = max(8, budget // per_row // 8 * 8)
    rb_target = (pl.cdiv(1024, wo) + 7) // 8 * 8     # aim for M = RB*Wo ~ 1024
    rb = max(8, min(rb_cap, rb_target, (ho + 7) // 8 * 8))
    return rb


# -------------------------------- wrapper -------------------------------------


def conv_bn_forward(x, weight, gamma, beta, *, stride=1, groups=1, act=None,
                    eps=1e-5):
    """Forward of ConvBNLayer.

    x:      (N, Cin, H, W)              float32 NCHW
    weight: (Cout, Cin//groups, k, k)   PyTorch OIHW conv weight (bias=False)
    gamma, beta: (Cout,)                BN affine params
    Returns (N, Cout, Ho, Wo) float32.  (Training-mode BN: batch statistics.)
    """
    n, cin, h, w = x.shape
    cout, cin_pg, kh, kw = weight.shape
    assert kh == kw, "square kernel expected"
    k = kh
    pad = (k - 1) // 2                     # mirrors nn.Conv2d(padding=(k-1)//2)
    ho = (h + 2 * pad - k) // stride + 1
    wo = (w + 2 * pad - k) // stride + 1
    cout_pg = cout // groups
    coutp = pl.cdiv(cout, _LANE) * _LANE   # lane-dense output channels
    kdim = k * k * cin                     # contraction size (all k*k taps folded)

    vmem_limit = _vmem_limit_bytes()
    rb = _pick_row_block(ho, wo, kdim, coutp, vmem_limit)
    nhb = pl.cdiv(ho, rb)
    hop = nhb * rb                         # Ho padded to whole row-blocks

    # --- glue: NHWC, pad, k*k-tap im2col (K = k*k*Cin), bf16 MXU feed ----------
    # TODO(synk): for large Cin (k*Cin >= ~128) keep only (Hp, Wp, Cin) in HBM and
    # do the taps in-kernel (halo row-blocks) to avoid the k^2-fold input duplication.
    x_nhwc = jnp.transpose(x, (0, 2, 3, 1))                      # (N, H, W, Cin)
    x_p = jnp.pad(x_nhwc, ((0, 0), (pad, pad), (pad, pad), (0, 0)))
    patches = []
    for di in range(k):
        for dj in range(k):
            patches.append(
                x_p[:, di:di + stride * (ho - 1) + 1:stride,
                    dj:dj + stride * (wo - 1) + 1:stride, :])    # (N, Ho, Wo, Cin)
    xe = jnp.concatenate(patches, axis=-1)                       # (N, Ho, Wo, k*k*Cin)
    xe = xe.reshape(n, ho * wo, kdim)
    # Zero-pad the grid rows: zero input rows -> zero conv output -> stats unaffected.
    xe = jnp.pad(xe, ((0, 0), (0, hop * wo - ho * wo), (0, 0)))
    xe = xe.astype(jnp.bfloat16)

    # --- weight: (k*k*Cin, Coutp); groups as block-diagonal; lane-padded -------
    # TODO(synk): for groups >> 1 (depthwise) slice per group instead of block-diag.
    w_full = jnp.zeros((k, k, cin, coutp), jnp.float32)
    for g in range(groups):
        w_g = jnp.transpose(weight[g * cout_pg:(g + 1) * cout_pg], (2, 3, 1, 0))
        w_full = w_full.at[:, :, g * cin_pg:(g + 1) * cin_pg,
                           g * cout_pg:(g + 1) * cout_pg].set(w_g)
    w2 = w_full.reshape(kdim, coutp).astype(jnp.bfloat16)

    # --- Pallas kernel: conv + fused per-(image, row-block) BN partial stats ---
    y, stats = pl.pallas_call(
        _conv_stats_kernel,
        out_shape=(
            jax.ShapeDtypeStruct((n, hop * wo, coutp), jnp.bfloat16),
            jax.ShapeDtypeStruct((n, nhb, 2, coutp), jnp.float32),
        ),
        grid_spec=pltpu.PrefetchScalarGridSpec(
            num_scalar_prefetch=0,
            grid=(n, nhb),
            in_specs=[
                pl.BlockSpec((1, rb * wo, kdim), lambda i, r: (i, r, 0)),
                pl.BlockSpec((kdim, coutp), lambda i, r: (0, 0)),
            ],
            out_specs=[
                pl.BlockSpec((1, rb * wo, coutp), lambda i, r: (i, r, 0)),
                pl.BlockSpec((1, 1, 2, coutp), lambda i, r: (i, r, 0, 0)),
            ],
        ),
        compiler_params=pltpu.CompilerParams(
            dimension_semantics=("parallel", "parallel"),
            vmem_limit_bytes=vmem_limit),
    )(xe, w2)

    # --- glue: combine tiny per-block stats -> per-channel scale/shift (f32) ---
    # Hierarchical per-block partials combined in f32; E[y^2]-E[y]^2 is fine for
    # conv activations (near-zero mean).
    # TODO(synk): centered two-pass variance if |mean| >> std ever becomes a concern.
    m = jnp.float32(n * ho * wo)
    ch_sum = jnp.sum(stats[:, :, 0, :], axis=(0, 1))[:cout]
    ch_sq = jnp.sum(stats[:, :, 1, :], axis=(0, 1))[:cout]
    mean = ch_sum / m
    var = ch_sq / m - mean * mean          # biased variance (training-mode BN)
    inv = lax.rsqrt(var + eps)
    scale = gamma.astype(jnp.float32) * inv
    shift = beta.astype(jnp.float32) - mean * scale

    # --- epilogue: affine + ReLU + channel slice fused by XLA into the NCHW
    # transpose: one read of the bf16 y, one write of the final output.
    y4 = y.reshape(n, hop, wo, coutp)[:, :ho, :, :cout].astype(jnp.float32)
    out = y4 * scale + shift
    if act == "relu":
        out = jnp.maximum(out, 0.0)
    return jnp.transpose(out, (0, 3, 1, 2))


# ------------------------------- reference ------------------------------------


def _reference(x, weight, gamma, beta, *, stride, groups, act, eps=1e-5):
    # Mirrors the kernel's numerics: bf16-rounded conv operands, f32 accumulation,
    # BN batch stats from the f32 conv output, bf16-stored conv output for the
    # affine pass (training-mode / biased-variance BatchNorm, as nn.BatchNorm2d
    # in train()).
    xr = x.astype(jnp.bfloat16).astype(jnp.float32)
    wr = weight.astype(jnp.bfloat16).astype(jnp.float32)
    k = weight.shape[-1]
    pad = (k - 1) // 2
    y = lax.conv_general_dilated(
        xr, wr, window_strides=(stride, stride),
        padding=[(pad, pad), (pad, pad)],
        dimension_numbers=("NCHW", "OIHW", "NCHW"),
        feature_group_count=groups)
    mean = jnp.mean(y, axis=(0, 2, 3), keepdims=True)
    var = jnp.mean((y - mean) ** 2, axis=(0, 2, 3), keepdims=True)
    inv = lax.rsqrt(var + eps)
    yb = y.astype(jnp.bfloat16).astype(jnp.float32)
    out = (yb - mean) * inv * gamma.reshape(1, -1, 1, 1) + beta.reshape(1, -1, 1, 1)
    if act == "relu":
        out = jnp.maximum(out, 0.0)
    return out


# ---------------------------------- main ---------------------------------------


if __name__ == "__main__":
    # ConvBNLayer(in_channels=4, out_channels=8, kernel_size=3, stride=1,
    #             groups=1, act='relu')
    in_channels, out_channels, kernel_size = 4, 8, 3
    stride, groups, act = 1, 1, "relu"

    key = jax.random.PRNGKey(0)
    kx, kw_, kg, kb = jax.random.split(key, 4)

    x = jax.random.normal(kx, (2, in_channels, 16, 16), jnp.float32)
    fan_in = in_channels // groups * kernel_size * kernel_size
    weight = jax.random.normal(
        kw_, (out_channels, in_channels // groups, kernel_size, kernel_size),
        jnp.float32) * (1.0 / math.sqrt(fan_in))
    gamma = 1.0 + 0.1 * jax.random.normal(kg, (out_channels,), jnp.float32)
    beta = 0.1 * jax.random.normal(kb, (out_channels,), jnp.float32)

    fwd = jax.jit(functools.partial(conv_bn_forward,
                                    stride=stride, groups=groups, act=act))
    out = jax.block_until_ready(fwd(x, weight, gamma, beta))

    ref = _reference(x, weight, gamma, beta, stride=stride, groups=groups, act=act)
    assert out.shape == ref.shape
    assert jnp.allclose(out, ref, rtol=2e-3, atol=2e-3), "mismatch vs reference"

    print("KERNEL_OK")
</pallas_src>

<mosaic_0001>
module attributes {stable_mosaic.version = 11 : i64} {
  func.func @_conv_stats_kernel(%arg0: i32, %arg1: i32, %arg2: memref<1x256x36xbf16, #tpu.memory_space<vmem>>, %arg3: memref<36x128xbf16, #tpu.memory_space<vmem>>, %arg4: memref<1x256x128xbf16, #tpu.memory_space<vmem>>, %arg5: memref<1x1x2x128xf32, #tpu.memory_space<vmem>>) attributes {dimension_semantics = [#tpu.dimension_semantics<parallel>, #tpu.dimension_semantics<parallel>], iteration_bounds = array<i64: 2, 1>, scalar_prefetch = 0 : i64, scratch_operands = 0 : i64, tpu.core_type = #tpu.core_type<tc>, window_params = [{transform_indices = @transform_0, window_bounds = array<i64: 1, 256, 36>}, {pipeline_mode = #tpu.pipeline_mode<synchronous>, transform_indices = @transform_1, window_bounds = array<i64: 36, 128>}, {transform_indices = @transform_2, window_bounds = array<i64: 1, 256, 128>}, {transform_indices = @transform_3, window_bounds = array<i64: 1, 1, 2, 128>}]} {
    %c0 = arith.constant 0 : index
    %c0_0 = arith.constant 0 : index
    %c0_1 = arith.constant 0 : index
    %0 = vector.load %arg2[%c0, %c0_0, %c0_1] : memref<1x256x36xbf16, #tpu.memory_space<vmem>>, vector<1x256x36xbf16>
    %1 = vector.shape_cast %0 : vector<1x256x36xbf16> to vector<256x36xbf16>
    %c0_2 = arith.constant 0 : index
    %c0_3 = arith.constant 0 : index
    %2 = vector.load %arg3[%c0_2, %c0_3] : memref<36x128xbf16, #tpu.memory_space<vmem>>, vector<36x128xbf16>
    %cst = arith.constant dense<0.000000e+00> : vector<256x128xf32>
    %3 = tpu.matmul %1, %2, %cst {dimension_numbers = #tpu.dot_dimension_numbers<[1], [0], [0], [1], [0, 0, 1, 1], [], []>} : vector<256x36xbf16>, vector<36x128xbf16>, vector<256x128xf32> -> vector<256x128xf32>
    %4 = arith.truncf %3 : vector<256x128xf32> to vector<256x128xbf16>
    %c0_4 = arith.constant 0 : index
    %c0_5 = arith.constant 0 : index
    %c0_6 = arith.constant 0 : index
    %5 = vector.load %arg4[%c0_4, %c0_5, %c0_6] : memref<1x256x128xbf16, #tpu.memory_space<vmem>>, vector<1x256x128xbf16>
    %6 = vector.shape_cast %5 : vector<1x256x128xbf16> to vector<256x128xbf16>
    %7 = vector.shape_cast %4 : vector<256x128xbf16> to vector<1x256x128xbf16>
    tpu.vector_store %arg4[%c0_4, %c0_5, %c0_6], %7 {strides = array<i32>} : memref<1x256x128xbf16, #tpu.memory_space<vmem>>, vector<1x256x128xbf16>,
    %cst_7 = arith.constant dense<0.000000e+00> : vector<128xf32>
    %8 = vector.multi_reduction <add>, %3, %cst_7 [0] : vector<256x128xf32> to vector<128xf32>
    %9 = vector.shape_cast %8 : vector<128xf32> to vector<1x128xf32>
    %10 = arith.mulf %3, %3 : vector<256x128xf32>
    %cst_8 = arith.constant dense<0.000000e+00> : vector<128xf32>
    %11 = vector.multi_reduction <add>, %10, %cst_8 [0] : vector<256x128xf32> to vector<128xf32>
    %12 = vector.shape_cast %11 : vector<128xf32> to vector<1x128xf32>
    %13 = tpu.concatenate %9, %12 in 0 : vector<1x128xf32>, vector<1x128xf32> -> vector<2x128xf32>
    %c0_9 = arith.constant 0 : index
    %c0_10 = arith.constant 0 : index
    %c0_11 = arith.constant 0 : index
    %c0_12 = arith.constant 0 : index
    %14 = vector.load %arg5[%c0_9, %c0_10, %c0_11, %c0_12] : memref<1x1x2x128xf32, #tpu.memory_space<vmem>>, vector<1x1x2x128xf32>
    %15 = vector.shape_cast %14 : vector<1x1x2x128xf32> to vector<2x128xf32>
    %16 = vector.shape_cast %13 : vector<2x128xf32> to vector<1x1x2x128xf32>
    tpu.vector_store %arg5[%c0_9, %c0_10, %c0_11, %c0_12], %16 {strides = array<i32>} : memref<1x1x2x128xf32, #tpu.memory_space<vmem>>, vector<1x1x2x128xf32>,
    return
  }
  func.func @transform_0(%arg0: i32, %arg1: i32) -> (i32, i32, i32) {
    %c0_i32 = arith.constant 0 : i32
    %c0_i32_0 = arith.constant 0 : i32
    return %arg0, %arg1, %c0_i32 : i32, i32, i32
  }
  func.func @transform_1(%arg0: i32, %arg1: i32) -> (i32, i32) {
    %c0_i32 = arith.constant 0 : i32
    %c0_i32_0 = arith.constant 0 : i32
    %c0_i32_1 = arith.constant 0 : i32
    return %c0_i32, %c0_i32_0 : i32, i32
  }
  func.func @transform_2(%arg0: i32, %arg1: i32) -> (i32, i32, i32) {
    %c0_i32 = arith.constant 0 : i32
    %c0_i32_0 = arith.constant 0 : i32
    return %arg0, %arg1, %c0_i32 : i32, i32, i32
  }
  func.func @transform_3(%arg0: i32, %arg1: i32) -> (i32, i32, i32, i32) {
    %c0_i32 = arith.constant 0 : i32
    %c0_i32_0 = arith.constant 0 : i32
    %c0_i32_1 = arith.constant 0 : i32
    return %arg0, %arg1, %c0_i32, %c0_i32_0 : i32, i32, i32, i32
  }
}

</mosaic_0001>

<llo_original>
// kernel: conv_bn_forward.1
$region0: #{conv_bn_forward.1}
  #allocation0 [shape = 'u32[]', space=smem, size = 0x4, offset = 0x4, fixed_abs, tag = 'smem constant byte address 0x4 - core index']
  #allocation1 [shape = 'u32[72,128]{1,0:T(1,128)}', space=vmem, size = 0x9000, scoped, tag = 'internal scratch']
  %s0 = inlined_call_operand.vmem [shape: bf16[2,256,36], index: 0, kind: input, shape index: {}]
  %s1 = inlined_call_operand.vmem [shape: bf16[36,128], index: 1, kind: input, shape index: {}]
  %s2 = inlined_call_operand.vmem [shape: bf16[2,256,128], index: 2, kind: output, shape index: {0}]
  %s3 = inlined_call_operand.vmem [shape: f32[2,1,2,128], index: 3, kind: output, shape index: {1}]
  %4 = xla_tuple %s2, %s3
  %s5 = sld [smem:[#allocation0]]
  $region49: #{conv_bn_forward.1} parent=0
    _
  %s7 = ssub.s32 1, %s5
  %s8 = scalar_select 0, %s7, %s5
  loop: start=0, step=1, limit=4
  $region2: #{conv_bn_forward.1} parent=0 // loop_pre_header
    _
  $region3: #{conv_bn_forward.1} parent=0 // loop_header
    %s10 = sphi 0, %s14
    %p11 = scmp.ge.s32.totalorder %s10, 4
    %s17 = sphi 0, %s29
    %s18 = sphi 0, %s25
    %s19 = sphi 0, %s17
    %s20 = sphi 0, %s18
    %s21 = sphi 0, %s19
    %s22 = sphi 0, %s20
    %s34 = sphi 0, %s36
    %s37 = sphi 0, %s34
    %s38 = sphi 0, %s37
    %s54 = sphi 0, %s38
    %s58 = sphi 0, %s58
    %s60 = sphi 0, %s58
    %s61 = sphi 0, %s60
    %s75 = sphi 0, %s61
    %s83 = sphi 0, %s85
    %s86 = sphi 0, %s83
    %s87 = sphi 0, %s86
    %s103 = sphi 0, %s87
    %s111 = sphi 0, %s113
    %s114 = sphi 0, %s111
    %s115 = sphi 0, %s114
    %s131 = sphi 0, %s115
  $region4: #{conv_bn_forward.1} parent=0 // loop_header_branch
    %13 = sbr.rel (%p11) target = $region8
  $region5: #{conv_bn_forward.1} parent=0 // loop_body
    %s15 = ssub.s32 %s10, 1
    %s16 = ssub.s32 %s10, 2
    %s23 = sadd.s32 1, %s18
    %p24 = scmp.ge.s32.totalorder %s23, 1
    %s25 = scalar_select %p24, 0, %s23
    %s26 = sadd.s32 1, %s17
    %s27 = scalar_select %p24, %s26, %s17
    %p28 = scmp.ge.s32.totalorder %s27, 2
    %s29 = scalar_select %p28, 0, %s27
    %s30 = ssub.s32 %s17, %s29
    %s31 = ssub.s32 %s18, %s25
    %s32 = sor.u32 %s30, %s31
    %p33 = scmp.eq.s32.totalorder %s32, 0
    %s35 = sadd.s32 %s34, 1
    %s36 = scalar_select %p33, %s34, %s35
    %p39 = pneg %p33
    %p40 = scmp.eq.s32.totalorder %s10, 1
    %p41 = por %p39, %p40
    %p42 = scmp.ne.s32.totalorder %s34, %s37
    %p43 = scmp.eq.s32.totalorder %s10, 0
    %p44 = por %p42, %p43
    %p45 = scmp.ne.s32.totalorder %s34, %s37
    %p46 = scmp.eq.s32.totalorder %s15, 1
    %p47 = por %p45, %p46
    %p48 = scmp.ne.s32.totalorder %s37, %s38
    %p49 = scmp.eq.s32.totalorder %s15, 0
    %p50 = por %p48, %p49
    %p51 = scmp.ne.s32.totalorder %s37, %s38
    %p52 = scmp.eq.s32.totalorder %s16, 1
    %p53 = por %p51, %p52
    %p55 = scmp.ne.s32.totalorder %s38, %s54
    %p56 = scmp.eq.s32.totalorder %s16, 0
    %p57 = por %p55, %p56
    %s59 = sadd.s32 %s58, 1
    %p62 = scmp.eq.s32.totalorder %s10, 1
    %p63 = scmp.ne.s32.totalorder %s58, %s60
    %p64 = scmp.eq.s32.totalorder %s10, 0
    %p65 = por %p63, %p64
    %p66 = scmp.ne.s32.totalorder %s58, %s60
    %p67 = scmp.eq.s32.totalorder %s15, 1
    %p68 = por %p66, %p67
    %p69 = scmp.ne.s32.totalorder %s60, %s61
    %p70 = scmp.eq.s32.totalorder %s15, 0
    %p71 = por %p69, %p70
    %p72 = scmp.ne.s32.totalorder %s60, %s61
    %p73 = scmp.eq.s32.totalorder %s16, 1
    %p74 = por %p72, %p73
    %p76 = scmp.ne.s32.totalorder %s61, %s75
    %p77 = scmp.eq.s32.totalorder %s16, 0
    %p78 = por %p76, %p77
    %s79 = ssub.s32 %s17, %s29
    %s80 = ssub.s32 %s18, %s25
    %s81 = sor.u32 %s79, %s80
    %p82 = scmp.eq.s32.totalorder %s81, 0
    %s84 = sadd.s32 %s83, 1
    %s85 = scalar_select %p82, %s83, %s84
    %p88 = pneg %p82
    %p89 = scmp.eq.s32.totalorder %s10, 1
    %p90 = por %p88, %p89
    %p91 = scmp.ne.s32.totalorder %s83, %s86
    %p92 = scmp.eq.s32.totalorder %s10, 0
    %p93 = por %p91, %p92
    %p94 = scmp.ne.s32.totalorder %s83, %s86
    %p95 = scmp.eq.s32.totalorder %s15, 1
    %p96 = por %p94, %p95
    %p97 = scmp.ne.s32.totalorder %s86, %s87
    %p98 = scmp.eq.s32.totalorder %s15, 0
    %p99 = por %p97, %p98
    %p100 = scmp.ne.s32.totalorder %s86, %s87
    %p101 = scmp.eq.s32.totalorder %s16, 1
    %p102 = por %p100, %p101
    %p104 = scmp.ne.s32.totalorder %s87, %s103
    %p105 = scmp.eq.s32.totalorder %s16, 0
    %p106 = por %p104, %p105
    %s107 = ssub.s32 %s17, %s29
    %s108 = ssub.s32 %s18, %s25
    %s109 = sor.u32 %s107, %s108
    %p110 = scmp.eq.s32.totalorder %s109, 0
    %s112 = sadd.s32 %s111, 1
    %s113 = scalar_select %p110, %s111, %s112
    %p116 = pneg %p110
    %p117 = scmp.eq.s32.totalorder %s10, 1
    %p118 = por %p116, %p117
    %p119 = scmp.ne.s32.totalorder %s111, %s114
    %p120 = scmp.eq.s32.totalorder %s10, 0
    %p121 = por %p119, %p120
    %p122 = scmp.ne.s32.totalorder %s111, %s114
    %p123 = scmp.eq.s32.totalorder %s15, 1
    %p124 = por %p122, %p123
    %p125 = scmp.ne.s32.totalorder %s114, %s115
    %p126 = scmp.eq.s32.totalorder %s15, 0
    %p127 = por %p125, %p126
    %p128 = scmp.ne.s32.totalorder %s114, %s115
    %p129 = scmp.eq.s32.totalorder %s16, 1
    %p130 = por %p128, %p129
    %p132 = scmp.ne.s32.totalorder %s115, %s131
    %p133 = scmp.eq.s32.totalorder %s16, 0
    %p134 = por %p132, %p133
    %p135 = scmp.le.s32.totalorder 1, %s10
    %p136 = scmp.lt.s32.totalorder %s10, 3
    %p137 = pnand %p135, %p136
    %p138 = pneg %p137
    // Predicated region
    $region9: #{conv_bn_forward.1} parent=5 // pred_check
      _
    $region10: #{conv_bn_forward.1} parent=5 // pred_check_branch
      %140 = sbr.rel (%p137) target = $region12
    $region11: #{conv_bn_forward.1} parent=5 // pred_region
      %s141 = ssub.s32 %s10, 1
      // Predicated region
      $region13: #{conv_bn_forward.1} parent=11 // pred_check
        %p142 = pneg %p71
      $region14: #{conv_bn_forward.1} parent=11 // pred_check_branch
        %144 = sbr.rel (%p142) target = $region16
      $region15: #{conv_bn_forward.1} parent=11 // pred_region
        _
      $region16: #{conv_bn_forward.1} parent=11 // pred_fallthru
        _
    $region12: #{conv_bn_forward.1} parent=5 // pred_fallthru
      _
    %p145 = scmp.lt.s32.totalorder %s10, 2
    // Predicated region
    $region17: #{conv_bn_forward.1} parent=5 // pred_check
      %p146 = pneg %p145
    $region18: #{conv_bn_forward.1} parent=5 // pred_check_branch
      %148 = sbr.rel (%p146) target = $region20
    $region19: #{conv_bn_forward.1} parent=5 // pred_region
      // Predicated region
      $region21: #{conv_bn_forward.1} parent=19 // pred_check
        %p149 = pneg %p44
      $region22: #{conv_bn_forward.1} parent=19 // pred_check_branch
        %151 = sbr.rel (%p149) target = $region24
      $region23: #{conv_bn_forward.1} parent=19 // pred_region
        %s152 = smul.u32 32, %s18
        %p153 = scmp.lt.s32.totalorder %s17, 1
        %s154 = scalar_select %p153, %s17, 1
        %p155 = scmp.lt.s32.totalorder %s152, 31
        %s156 = scalar_select %p155, %s152, 31
        %s157 = smul.addr %s154, 32
        %s158 = sadd.s32 %s156, %s157
        %s159 = smul.addr %s158, 4
        %s160 = scalar_lea.vmem %s0, %s159
        %s161 = smul.u32 32, %s18
      $region24: #{conv_bn_forward.1} parent=19 // pred_fallthru
        _
    $region20: #{conv_bn_forward.1} parent=5 // pred_fallthru
      _
    %p162 = scmp.le.s32.totalorder 1, %s10
    %p163 = scmp.lt.s32.totalorder %s10, 3
    %p164 = pnand %p162, %p163
    %p165 = pneg %p164
    // Predicated region
    $region25: #{conv_bn_forward.1} parent=5 // pred_check
      _
    $region26: #{conv_bn_forward.1} parent=5 // pred_check_branch
      %167 = sbr.rel (%p164) target = $region28
    $region27: #{conv_bn_forward.1} parent=5 // pred_region
      %s168 = ssub.s32 %s10, 1
      %s169 = smul.u32 32, %s20
      %p170 = scmp.lt.s32.totalorder %s19, 1
      %s171 = scalar_select %p170, %s19, 1
      %p172 = scmp.lt.s32.totalorder %s169, 31
      %s173 = scalar_select %p172, %s169, 31
      %s174 = smul.addr %s171, 32
      %s175 = sadd.s32 %s173, %s174
      %s176 = smul.addr %s175, 4
      %s177 = scalar_lea.vmem %s0, %s176
      %p178 = pneg %p50
      %p179 = pneg %p47
      %p180 = pneg %p71
      %p181 = pneg %p68
      %p182 = pneg %p99
      %p183 = pneg %p96
      %s184 = smul.u32 32, %s20
      %p185 = scmp.lt.s32.totalorder %s19, 1
      %s186 = scalar_select %p185, %s19, 1
      %p187 = scmp.lt.s32.totalorder %s184, 31
      %s188 = scalar_select %p187, %s184, 31
      %s189 = smul.addr %s186, 32
      %s190 = sadd.s32 %s188, %s189
      %s191 = smul.addr %s190, 4
      %s192 = scalar_lea.vmem %s2, %s191
      %p193 = pneg %p127
      %p194 = pneg %p124
      %p195 = scmp.lt.s32.totalorder %s19, 1
      %s196 = scalar_select %p195, %s19, 1
      %p197 = scmp.lt.s32.totalorder %s20, 0
      %s198 = scalar_select %p197, %s20, 0
      %s199 = sadd.s32 %s198, %s196
      %s200 = smul.addr %s199, 2
      %s201 = scalar_lea.vmem %s3, %s200
      %s202 = smul.u32 32, %s20
      %p203 = scmp.lt.s32.totalorder %s19, 1
      %s204 = scalar_select %p203, %s19, 1
      %p205 = scmp.lt.s32.totalorder %s202, 31
      %s206 = scalar_select %p205, %s202, 31
      %s207 = smul.addr %s204, 32
      %s208 = sadd.s32 %s206, %s207
      %s209 = smul.addr %s208, 4
      %s210 = scalar_lea.vmem %s0, %s209
      %s211 = smul.u32 32, %s20
      %s212 = smul.u32 32, %s20
      %p213 = scmp.lt.s32.totalorder %s19, 1
      %s214 = scalar_select %p213, %s19, 1
      %p215 = scmp.lt.s32.totalorder %s212, 31
      %s216 = scalar_select %p215, %s212, 31
      %s217 = smul.addr %s214, 32
      %s218 = sadd.s32 %s216, %s217
      %s219 = smul.addr %s218, 4
      %s220 = scalar_lea.vmem %s2, %s219
      %s221 = smul.u32 32, %s20
      %p222 = scmp.lt.s32.totalorder %s19, 1
      %s223 = scalar_select %p222, %s19, 1
      %p224 = scmp.lt.s32.totalorder %s20, 0
      %s225 = scalar_select %p224, %s20, 0
      %s226 = sadd.s32 %s225, %s223
      %s227 = smul.addr %s226, 2
      %s228 = scalar_lea.vmem %s3, %s227
      %v230 = vld [vmem:[%s210] sm:$0xf]
      %v231 = vld [vmem:[%s210 + $0x4] sm:$0xf]
      %v232 = vld [vmem:[%s210 + $0x8] sm:$0xf]
      %v233 = vld [vmem:[%s210 + $0xc] sm:$0xf]
      %v234 = vld [vmem:[%s210 + $0x10] sm:$0xf]
      %v235 = vld [vmem:[%s210 + $0x14] sm:$0xf]
      %v236 = vld [vmem:[%s210 + $0x18] sm:$0xf]
      %v237 = vld [vmem:[%s210 + $0x1c] sm:$0xf]
      %v238 = vld [vmem:[%s210 + $0x20] sm:$0xf]
      %v239 = vld [vmem:[%s210 + $0x24] sm:$0xf]
      %v240 = vld [vmem:[%s210 + $0x28] sm:$0xf]
      %v241 = vld [vmem:[%s210 + $0x2c] sm:$0xf]
      %v242 = vld [vmem:[%s210 + $0x30] sm:$0xf]
      %v243 = vld [vmem:[%s210 + $0x34] sm:$0xf]
      %v244 = vld [vmem:[%s210 + $0x38] sm:$0xf]
      %v245 = vld [vmem:[%s210 + $0x3c] sm:$0xf]
      %v246 = vld [vmem:[%s210 + $0x40] sm:$0xf]
      %v247 = vld [vmem:[%s210 + $0x44] sm:$0xf]
      %v248 = vld [vmem:[%s210 + $0x48] sm:$0xf]
      %v249 = vld [vmem:[%s210 + $0x4c] sm:$0xf]
      %v250 = vld [vmem:[%s210 + $0x50] sm:$0xf]
      %v251 = vld [vmem:[%s210 + $0x54] sm:$0xf]
      %v252 = vld [vmem:[%s210 + $0x58] sm:$0xf]
      %v253 = vld [vmem:[%s210 + $0x5c] sm:$0xf]
      %v254 = vld [vmem:[%s210 + $0x60] sm:$0xf]
      %v255 = vld [vmem:[%s210 + $0x64] sm:$0xf]
      %v256 = vld [vmem:[%s210 + $0x68] sm:$0xf]
      %v257 = vld [vmem:[%s210 + $0x6c] sm:$0xf]
      %v258 = vld [vmem:[%s210 + $0x70] sm:$0xf]
      %v259 = vld [vmem:[%s210 + $0x74] sm:$0xf]
      %v260 = vld [vmem:[%s210 + $0x78] sm:$0xf]
      %v261 = vld [vmem:[%s210 + $0x7c] sm:$0xf]
      %v262 = vld [vmem:[%s1] sm:$0xf]
      %v263 = vld [vmem:[%s1 + $0x4] sm:$0xf]
      %v264 = vld [vmem:[%s1 + $0x8] sm:$0xf]
      %v265 = vld [vmem:[%s1 + $0xc] sm:$0xf]
      %v266 = vld [vmem:[%s1 + $0x10] sm:$0x3]
      %v299 = vunpack.c.l.b16 %v230
      %v300 = vunpack.c.l.b16 %v231
      %v301 = vunpack.c.l.b16 %v232
      %v302 = vunpack.c.l.b16 %v233
      %v303 = vunpack.c.l.b16 %v234
      %v304 = vunpack.c.l.b16 %v235
      %v305 = vunpack.c.l.b16 %v236
      %v306 = vunpack.c.l.b16 %v237
      %v307 = vunpack.c.l.b16 %v238
      %v308 = vunpack.c.l.b16 %v239
      %v309 = vunpack.c.l.b16 %v240
      %v310 = vunpack.c.l.b16 %v241
      %v311 = vunpack.c.l.b16 %v242
      %v312 = vunpack.c.l.b16 %v243
      %v313 = vunpack.c.l.b16 %v244
      %v314 = vunpack.c.l.b16 %v245
      %v315 = vunpack.c.l.b16 %v246
      %v316 = vunpack.c.l.b16 %v247
      %v317 = vunpack.c.l.b16 %v248
      %v318 = vunpack.c.l.b16 %v249
      %v319 = vunpack.c.l.b16 %v250
      %v320 = vunpack.c.l.b16 %v251
      %v321 = vunpack.c.l.b16 %v252
      %v322 = vunpack.c.l.b16 %v253
      %v323 = vunpack.c.l.b16 %v254
      %v324 = vunpack.c.l.b16 %v255
      %v325 = vunpack.c.l.b16 %v256
      %v326 = vunpack.c.l.b16 %v257
      %v327 = vunpack.c.l.b16 %v258
      %v328 = vunpack.c.l.b16 %v259
      %v329 = vunpack.c.l.b16 %v260
      %v330 = vunpack.c.l.b16 %v261
      %v331 = vpack.c.b16 %v300, %v299
      %v332 = vpack.c.b16 %v302, %v301
      %v333 = vpack.c.b16 %v304, %v303
      %v334 = vpack.c.b16 %v306, %v305
      %v335 = vpack.c.b16 %v308, %v307
      %v336 = vpack.c.b16 %v310, %v309
      %v337 = vpack.c.b16 %v312, %v311
      %v338 = vpack.c.b16 %v314, %v313
      %v339 = vpack.c.b16 %v316, %v315
      %v340 = vpack.c.b16 %v318, %v317
      %v341 = vpack.c.b16 %v320, %v319
      %v342 = vpack.c.b16 %v322, %v321
      %v343 = vpack.c.b16 %v324, %v323
      %v344 = vpack.c.b16 %v326, %v325
      %v345 = vpack.c.b16 %v328, %v327
      %v346 = vpack.c.b16 %v330, %v329
      %v352 = vunpack.c.l.b16 %v262
      %v353 = vunpack.c.l.b16 %v263
      %v354 = vunpack.c.l.b16 %v264
      %v355 = vunpack.c.l.b16 %v265
      %v356 = vunpack.c.l.b16 %v266
      %v357 = vpack.c.b16 %v353, %v352
      %v358 = vpack.c.b16 %v355, %v354
      %v359 = vpack.c.b16 %v356, %v356
      %vm362 = vcmask 293888
      %v364 = vsel %vm362, %v331, 0
      %v367 = vsel %vm362, %v332, 0
      %v370 = vsel %vm362, %v333, 0
      %v373 = vsel %vm362, %v334, 0
      %v376 = vsel %vm362, %v335, 0
      %v379 = vsel %vm362, %v336, 0
      %v382 = vsel %vm362, %v337, 0
      %v385 = vsel %vm362, %v338, 0
      %v388 = vsel %vm362, %v339, 0
      %v391 = vsel %vm362, %v340, 0
      %v394 = vsel %vm362, %v341, 0
      %v397 = vsel %vm362, %v342, 0
      %v400 = vsel %vm362, %v343, 0
      %v403 = vsel %vm362, %v344, 0
      %v406 = vsel %vm362, %v345, 0
      %v409 = vsel %vm362, %v346, 0
      %vm411 = vcmask 1041408
      %v413 = vsel %vm411, %v359, 0
      %415 = vmatpush.bf16.msra.mxu0 0
      %416 = vmatpush.bf16.msra.mxu0 0
      %417 = vmatpush.bf16.msra.mxu0 0
      %418 = vmatpush.bf16.msra.mxu0 0
      %419 = vmatpush.bf16.msra.mxu0 0
      %420 = vmatpush.bf16.msra.mxu0 %v413
      %421 = vmatpush.bf16.msra.mxu0 %v358
      %422 = vmatpush.bf16.msra.mxu0 %v357
      %423 = vmatmul.bf16.gmra.mxu0 %v364
      %v424 = vpop.f32.mrf.mxu0
      %v425 = vadd.f32 0.0, %v424
      %v426 = vpop.f32.mrf.mxu0
      %v427 = vadd.f32 0.0, %v426
      %428 = vmatmul.bf16.gmra.mxu0 %v367
      %v429 = vpop.f32.mrf.mxu0
      %v430 = vadd.f32 0.0, %v429
      %v431 = vpop.f32.mrf.mxu0
      %v432 = vadd.f32 0.0, %v431
      %433 = vmatmul.bf16.gmra.mxu0 %v370
      %v434 = vpop.f32.mrf.mxu0
      %v435 = vadd.f32 0.0, %v434
      %v436 = vpop.f32.mrf.mxu0
      %v437 = vadd.f32 0.0, %v436
      %438 = vmatmul.bf16.gmra.mxu0 %v373
      %v439 = vpop.f32.mrf.mxu0
      %v440 = vadd.f32 0.0, %v439
      %v441 = vpop.f32.mrf.mxu0
      %v442 = vadd.f32 0.0, %v441
      %443 = vmatmul.bf16.gmra.mxu0 %v376
      %v444 = vpop.f32.mrf.mxu0
      %v445 = vadd.f32 0.0, %v444
      %v446 = vpop.f32.mrf.mxu0
      %v447 = vadd.f32 0.0, %v446
      %448 = vmatmul.bf16.gmra.mxu0 %v379
      %v449 = vpop.f32.mrf.mxu0
      %v450 = vadd.f32 0.0, %v449
      %v451 = vpop.f32.mrf.mxu0
      %v452 = vadd.f32 0.0, %v451
      %453 = vmatmul.bf16.gmra.mxu0 %v382
      %v454 = vpop.f32.mrf.mxu0
      %v455 = vadd.f32 0.0, %v454
      %v456 = vpop.f32.mrf.mxu0
      %v457 = vadd.f32 0.0, %v456
      %458 = vmatmul.bf16.gmra.mxu0 %v385
      %v459 = vpop.f32.mrf.mxu0
      %v460 = vadd.f32 0.0, %v459
      %v461 = vpop.f32.mrf.mxu0
      %v462 = vadd.f32 0.0, %v461
      %463 = vmatmul.bf16.gmra.mxu0 %v388
      %v464 = vpop.f32.mrf.mxu0
      %v465 = vadd.f32 0.0, %v464
      %v466 = vpop.f32.mrf.mxu0
      %v467 = vadd.f32 0.0, %v466
      %468 = vmatmul.bf16.gmra.mxu0 %v391
      %v469 = vpop.f32.mrf.mxu0
      %v470 = vadd.f32 0.0, %v469
      %v471 = vpop.f32.mrf.mxu0
      %v472 = vadd.f32 0.0, %v471
      %473 = vmatmul.bf16.gmra.mxu0 %v394
      %v474 = vpop.f32.mrf.mxu0
      %v475 = vadd.f32 0.0, %v474
      %v476 = vpop.f32.mrf.mxu0
      %v477 = vadd.f32 0.0, %v476
      %478 = vmatmul.bf16.gmra.mxu0 %v397
      %v479 = vpop.f32.mrf.mxu0
      %v480 = vadd.f32 0.0, %v479
      %v481 = vpop.f32.mrf.mxu0
      %v482 = vadd.f32 0.0, %v481
      %483 = vmatmul.bf16.gmra.mxu0 %v400
      %v484 = vpop.f32.mrf.mxu0
      %v485 = vadd.f32 0.0, %v484
      %v486 = vpop.f32.mrf.mxu0
      %v487 = vadd.f32 0.0, %v486
      %488 = vmatmul.bf16.gmra.mxu0 %v403
      %v489 = vpop.f32.mrf.mxu0
      %v490 = vadd.f32 0.0, %v489
      %v491 = vpop.f32.mrf.mxu0
      %v492 = vadd.f32 0.0, %v491
      %493 = vmatmul.bf16.gmra.mxu0 %v406
      %v494 = vpop.f32.mrf.mxu0
      %v495 = vadd.f32 0.0, %v494
      %v496 = vpop.f32.mrf.mxu0
      %v497 = vadd.f32 0.0, %v496
      %498 = vmatmul.bf16.gmra.mxu0 %v409
      %v499 = vpop.f32.mrf.mxu0
      %v500 = vadd.f32 0.0, %v499
      %v501 = vpop.f32.mrf.mxu0
      %v502 = vadd.f32 0.0, %v501
      %503 = vdwg.mxu0
      %v504 = vpack.c.bf16 %v425, %v425
      %v505 = vpack.c.bf16 %v427, %v427
      %v506 = vpack.c.bf16 %v430, %v430
      %v507 = vpack.c.bf16 %v432, %v432
      %v508 = vpack.c.bf16 %v435, %v435
      %v509 = vpack.c.bf16 %v437, %v437
      %v510 = vpack.c.bf16 %v440, %v440
      %v511 = vpack.c.bf16 %v442, %v442
      %v512 = vpack.c.bf16 %v445, %v445
      %v513 = vpack.c.bf16 %v447, %v447
      %v514 = vpack.c.bf16 %v450, %v450
      %v515 = vpack.c.bf16 %v452, %v452
      %v516 = vpack.c.bf16 %v455, %v455
      %v517 = vpack.c.bf16 %v457, %v457
      %v518 = vpack.c.bf16 %v460, %v460
      %v519 = vpack.c.bf16 %v462, %v462
      %v520 = vpack.c.bf16 %v465, %v465
      %v521 = vpack.c.bf16 %v467, %v467
      %v522 = vpack.c.bf16 %v470, %v470
      %v523 = vpack.c.bf16 %v472, %v472
      %v524 = vpack.c.bf16 %v475, %v475
      %v525 = vpack.c.bf16 %v477, %v477
      %v526 = vpack.c.bf16 %v480, %v480
      %v527 = vpack.c.bf16 %v482, %v482
      %v528 = vpack.c.bf16 %v485, %v485
      %v529 = vpack.c.bf16 %v487, %v487
      %v530 = vpack.c.bf16 %v490, %v490
      %v531 = vpack.c.bf16 %v492, %v492
      %v532 = vpack.c.bf16 %v495, %v495
      %v533 = vpack.c.bf16 %v497, %v497
      %v534 = vpack.c.bf16 %v500, %v500
      %v535 = vpack.c.bf16 %v502, %v502
      %536 = vst [vmem:[%s220] sm:$0xf] %v504
      %537 = vst [vmem:[%s220 + $0x4] sm:$0xf] %v505
      %538 = vst [vmem:[%s220 + $0x8] sm:$0xf] %v506
      %539 = vst [vmem:[%s220 + $0xc] sm:$0xf] %v507
      %540 = vst [vmem:[%s220 + $0x10] sm:$0xf] %v508
      %541 = vst [vmem:[%s220 + $0x14] sm:$0xf] %v509
      %542 = vst [vmem:[%s220 + $0x18] sm:$0xf] %v510
      %543 = vst [vmem:[%s220 + $0x1c] sm:$0xf] %v511
      %544 = vst [vmem:[%s220 + $0x20] sm:$0xf] %v512
      %545 = vst [vmem:[%s220 + $0x24] sm:$0xf] %v513
      %546 = vst [vmem:[%s220 + $0x28] sm:$0xf] %v514
      %547 = vst [vmem:[%s220 + $0x2c] sm:$0xf] %v515
      %548 = vst [vmem:[%s220 + $0x30] sm:$0xf] %v516
      %549 = vst [vmem:[%s220 + $0x34] sm:$0xf] %v517
      %550 = vst [vmem:[%s220 + $0x38] sm:$0xf] %v518
      %551 = vst [vmem:[%s220 + $0x3c] sm:$0xf] %v519
      %552 = vst [vmem:[%s220 + $0x40] sm:$0xf] %v520
      %553 = vst [vmem:[%s220 + $0x44] sm:$0xf] %v521
      %554 = vst [vmem:[%s220 + $0x48] sm:$0xf] %v522
      %555 = vst [vmem:[%s220 + $0x4c] sm:$0xf] %v523
      %556 = vst [vmem:[%s220 + $0x50] sm:$0xf] %v524
      %557 = vst [vmem:[%s220 + $0x54] sm:$0xf] %v525
      %558 = vst [vmem:[%s220 + $0x58] sm:$0xf] %v526
      %559 = vst [vmem:[%s220 + $0x5c] sm:$0xf] %v527
      %560 = vst [vmem:[%s220 + $0x60] sm:$0xf] %v528
      %561 = vst [vmem:[%s220 + $0x64] sm:$0xf] %v529
      %562 = vst [vmem:[%s220 + $0x68] sm:$0xf] %v530
      %563 = vst [vmem:[%s220 + $0x6c] sm:$0xf] %v531
      %564 = vst [vmem:[%s220 + $0x70] sm:$0xf] %v532
      %565 = vst [vmem:[%s220 + $0x74] sm:$0xf] %v533
      %566 = vst [vmem:[%s220 + $0x78] sm:$0xf] %v534
      %567 = vst [vmem:[%s220 + $0x7c] sm:$0xf] %v535
      %v568 = vadd.f32 %v425, %v427
      %v569 = vadd.f32 %v568, %v430
      %v570 = vadd.f32 %v569, %v432
      %v571 = vadd.f32 %v570, %v435
      %v572 = vadd.f32 %v571, %v437
      %v573 = vadd.f32 %v572, %v440
      %v574 = vadd.f32 %v573, %v442
      %v575 = vadd.f32 %v574, %v445
      %v576 = vadd.f32 %v575, %v447
      %v577 = vadd.f32 %v576, %v450
      %v578 = vadd.f32 %v577, %v452
      %v579 = vadd.f32 %v578, %v455
      %v580 = vadd.f32 %v579, %v457
      %v581 = vadd.f32 %v580, %v460
      %v582 = vadd.f32 %v581, %v462
      %v583 = vadd.f32 %v582, %v465
      %v584 = vadd.f32 %v583, %v467
      %v585 = vadd.f32 %v584, %v470
      %v586 = vadd.f32 %v585, %v472
      %v587 = vadd.f32 %v586, %v475
      %v588 = vadd.f32 %v587, %v477
      %v589 = vadd.f32 %v588, %v480
      %v590 = vadd.f32 %v589, %v482
      %v591 = vadd.f32 %v590, %v485
      %v592 = vadd.f32 %v591, %v487
      %v593 = vadd.f32 %v592, %v490
      %v594 = vadd.f32 %v593, %v492
      %v595 = vadd.f32 %v594, %v495
      %v596 = vadd.f32 %v595, %v497
      %v597 = vadd.f32 %v596, %v500
      %v598 = vadd.f32 %v597, %v502
      %v599 = vrot.slane %v598, 4
      %v600 = vadd.f32 %v598, %v599
      %v601 = vrot.slane %v600, 2
      %v602 = vadd.f32 %v600, %v601
      %v603 = vrot.slane %v602, 1
      %v604 = vadd.f32 %v602, %v603
      %v605 = vmul.f32 %v425, %v425
      %v606 = vmul.f32 %v427, %v427
      %v607 = vmul.f32 %v430, %v430
      %v608 = vmul.f32 %v432, %v432
      %v609 = vmul.f32 %v435, %v435
      %v610 = vmul.f32 %v437, %v437
      %v611 = vmul.f32 %v440, %v440
      %v612 = vmul.f32 %v442, %v442
      %v613 = vmul.f32 %v445, %v445
      %v614 = vmul.f32 %v447, %v447
      %v615 = vmul.f32 %v450, %v450
      %v616 = vmul.f32 %v452, %v452
      %v617 = vmul.f32 %v455, %v455
      %v618 = vmul.f32 %v457, %v457
      %v619 = vmul.f32 %v460, %v460
      %v620 = vmul.f32 %v462, %v462
      %v621 = vmul.f32 %v465, %v465
      %v622 = vmul.f32 %v467, %v467
      %v623 = vmul.f32 %v470, %v470
      %v624 = vmul.f32 %v472, %v472
      %v625 = vmul.f32 %v475, %v475
      %v626 = vmul.f32 %v477, %v477
      %v627 = vmul.f32 %v480, %v480
      %v628 = vmul.f32 %v482, %v482
      %v629 = vmul.f32 %v485, %v485
      %v630 = vmul.f32 %v487, %v487
      %v631 = vmul.f32 %v490, %v490
      %v632 = vmul.f32 %v492, %v492
      %v633 = vmul.f32 %v495, %v495
      %v634 = vmul.f32 %v497, %v497
      %v635 = vmul.f32 %v500, %v500
      %v636 = vmul.f32 %v502, %v502
      %v637 = vadd.f32 %v605, %v606
      %v638 = vadd.f32 %v637, %v607
      %v639 = vadd.f32 %v638, %v608
      %v640 = vadd.f32 %v639, %v609
      %v641 = vadd.f32 %v640, %v610
      %v642 = vadd.f32 %v641, %v611
      %v643 = vadd.f32 %v642, %v612
      %v644 = vadd.f32 %v643, %v613
      %v645 = vadd.f32 %v644, %v614
      %v646 = vadd.f32 %v645, %v615
      %v647 = vadd.f32 %v646, %v616
      %v648 = vadd.f32 %v647, %v617
      %v649 = vadd.f32 %v648, %v618
      %v650 = vadd.f32 %v649, %v619
      %v651 = vadd.f32 %v650, %v620
      %v652 = vadd.f32 %v651, %v621
      %v653 = vadd.f32 %v652, %v622
      %v654 = vadd.f32 %v653, %v623
      %v655 = vadd.f32 %v654, %v624
      %v656 = vadd.f32 %v655, %v625
      %v657 = vadd.f32 %v656, %v626
      %v658 = vadd.f32 %v657, %v627
      %v659 = vadd.f32 %v658, %v628
      %v660 = vadd.f32 %v659, %v629
      %v661 = vadd.f32 %v660, %v630
      %v662 = vadd.f32 %v661, %v631
      %v663 = vadd.f32 %v662, %v632
      %v664 = vadd.f32 %v663, %v633
      %v665 = vadd.f32 %v664, %v634
      %v666 = vadd.f32 %v665, %v635
      %v667 = vadd.f32 %v666, %v636
      %v668 = vrot.slane %v667, 4
      %v669 = vadd.f32 %v667, %v668
      %v670 = vrot.slane %v669, 2
      %v671 = vadd.f32 %v669, %v670
      %v672 = vrot.slane %v671, 1
      %v673 = vadd.f32 %v671, %v672
      %vm674 = vcmask 1040384
      %v675 = vsel %vm674, %v604, %v673
      %676 = vst [vmem:[%s228] sm:$0x3] %v675
      %s677 = smul.u32 32, %s20
      %p678 = scmp.lt.s32.totalorder %s19, 1
      %s679 = scalar_select %p678, %s19, 1
      %p680 = scmp.lt.s32.totalorder %s677, 31
      %s681 = scalar_select %p680, %s677, 31
      %s682 = smul.addr %s679, 32
      %s683 = sadd.s32 %s681, %s682
      %s684 = smul.addr %s683, 4
      %s685 = scalar_lea.vmem %s2, %s684
      %p686 = scmp.lt.s32.totalorder %s19, 1
      %s687 = scalar_select %p686, %s19, 1
      %p688 = scmp.lt.s32.totalorder %s20, 0
      %s689 = scalar_select %p688, %s20, 0
      %s690 = sadd.s32 %s689, %s687
      %s691 = smul.addr %s690, 2
      %s692 = scalar_lea.vmem %s3, %s691
      // Predicated region
      $region29: #{conv_bn_forward.1} parent=27 // pred_check
        %p693 = pneg %p96
      $region30: #{conv_bn_forward.1} parent=27 // pred_check_branch
        %695 = sbr.rel (%p693) target = $region32
      $region31: #{conv_bn_forward.1} parent=27 // pred_region
        %s696 = smul.u32 32, %s20
      $region32: #{conv_bn_forward.1} parent=27 // pred_fallthru
        _
      // Predicated region
      $region33: #{conv_bn_forward.1} parent=27 // pred_check
        %p697 = pneg %p124
      $region34: #{conv_bn_forward.1} parent=27 // pred_check_branch
        %699 = sbr.rel (%p697) target = $region36
      $region35: #{conv_bn_forward.1} parent=27 // pred_region
        _
      $region36: #{conv_bn_forward.1} parent=27 // pred_fallthru
        _
    $region28: #{conv_bn_forward.1} parent=5 // pred_fallthru
      _
    %p700 = scmp.le.s32.totalorder 2, %s10
    // Predicated region
    $region37: #{conv_bn_forward.1} parent=5 // pred_check
      %p701 = pneg %p700
    $region38: #{conv_bn_forward.1} parent=5 // pred_check_branch
      %703 = sbr.rel (%p701) target = $region40
    $region39: #{conv_bn_forward.1} parent=5 // pred_region
      %s704 = ssub.s32 %s10, 2
      // Predicated region
      $region41: #{conv_bn_forward.1} parent=39 // pred_check
        %p705 = pneg %p102
      $region42: #{conv_bn_forward.1} parent=39 // pred_check_branch
        %707 = sbr.rel (%p705) target = $region44
      $region43: #{conv_bn_forward.1} parent=39 // pred_region
        %s708 = smul.u32 32, %s22
        %p709 = scmp.lt.s32.totalorder %s21, 1
        %s710 = scalar_select %p709, %s21, 1
        %p711 = scmp.lt.s32.totalorder %s708, 31
        %s712 = scalar_select %p711, %s708, 31
        %s713 = smul.addr %s710, 32
        %s714 = sadd.s32 %s712, %s713
        %s715 = smul.addr %s714, 4
        %s716 = scalar_lea.vmem %s2, %s715
      $region44: #{conv_bn_forward.1} parent=39 // pred_fallthru
        _
      // Predicated region
      $region45: #{conv_bn_forward.1} parent=39 // pred_check
        %p717 = pneg %p130
      $region46: #{conv_bn_forward.1} parent=39 // pred_check_branch
        %719 = sbr.rel (%p717) target = $region48
      $region47: #{conv_bn_forward.1} parent=39 // pred_region
        %p720 = scmp.lt.s32.totalorder %s21, 1
        %s721 = scalar_select %p720, %s21, 1
        %p722 = scmp.lt.s32.totalorder %s22, 0
        %s723 = scalar_select %p722, %s22, 0
        %s724 = sadd.s32 %s723, %s721
        %s725 = smul.addr %s724, 2
        %s726 = scalar_lea.vmem %s3, %s725
      $region48: #{conv_bn_forward.1} parent=39 // pred_fallthru
        _
    $region40: #{conv_bn_forward.1} parent=5 // pred_fallthru
      _
  $region6: #{conv_bn_forward.1} parent=0 // loop_footer
    %s14 = sadd.s32 1, %s10
  $region7: #{conv_bn_forward.1} parent=0 // loop_footer_branch
    %9 = sbr.rel target = $region3
  $region8: #{conv_bn_forward.1} parent=0 // loop_exit
    _

</llo_original>
